<compile_context>
chip_gen: v7x
topology: tpu7x:2x2x1
jax: 0.10.0
libtpu: 0.0.40
codegen_flags: <defaults>
</compile_context>

<pallas_src>
import jax
import jax.numpy as jnp
from jax.experimental import pallas as pl
from jax.experimental.pallas import tpu as pltpu


def _gather_concat_kernel(trn_ids_ref, pre_ids_ref,   # scalar-prefetch refs (SMEM, unused in body)
                          trn_row_ref, proj_row_ref,  # (1, 1, D) gathered rows (VMEM)
                          out_ref):                    # (1, 1, 2*D) output block (VMEM)
    del trn_ids_ref, pre_ids_ref
    d = trn_row_ref.shape[-1]
    # Fusion 'cat': trainable first, then projected pretrained. Direct half
    # writes — no concatenate, no extra VMEM copy.
    out_ref[:, :, :d] = trn_row_ref[...]
    out_ref[:, :, d:] = proj_row_ref[...]


def pretrain_embedding_forward(input_ids, pretrained_ids,
                               pre_table, proj_w, trn_table):
    """input_ids, pretrained_ids: [B, S] int -> [B, S, 2*D] float32."""
    B, S = input_ids.shape
    N = B * S
    V_pre, P = pre_table.shape
    V_trn, D = trn_table.shape
    assert proj_w.shape == (P, D)

    # Fold the bias-free Linear into the pretrained table once (full-efficiency
    # XLA matmul); gather(pre_table, ids) @ W == gather(pre_table @ W, ids).
    proj_table = jnp.dot(pre_table, proj_w,
                         precision=jax.lax.Precision.HIGHEST)        # [V_pre, D]

    # Clamp ids so a bad id can never trigger an OOB row DMA (torch would
    # raise; here we just read a valid row).
    trn_ids = jnp.clip(input_ids.reshape(N).astype(jnp.int32), 0, V_trn - 1)
    pre_ids = jnp.clip(pretrained_ids.reshape(N).astype(jnp.int32), 0, V_pre - 1)

    # [V, 1, D] so the last-two block dims equal the full array dims.
    trn_3d = trn_table.reshape(V_trn, 1, D)
    proj_3d = proj_table.reshape(V_pre, 1, D)

    grid_spec = pltpu.PrefetchScalarGridSpec(
        num_scalar_prefetch=2,          # trn_ids, pre_ids -> SMEM, fed to index_maps
        grid=(N,),                      # one token per grid step, double-buffered row DMAs
        in_specs=[
            # data-dependent row gather: block index == row id (block height 1)
            pl.BlockSpec((1, 1, D), lambda i, trn_ids, pre_ids: (trn_ids[i], 0, 0)),
            pl.BlockSpec((1, 1, D), lambda i, trn_ids, pre_ids: (pre_ids[i], 0, 0)),
        ],
        out_specs=pl.BlockSpec((1, 1, 2 * D), lambda i, trn_ids, pre_ids: (i, 0, 0)),
    )

    out = pl.pallas_call(
        _gather_concat_kernel,
        out_shape=jax.ShapeDtypeStruct((N, 1, 2 * D), trn_table.dtype),
        grid_spec=grid_spec,
        compiler_params=pltpu.CompilerParams(
            dimension_semantics=("parallel",)),   # split token axis across v7x's 2 TCs
    )(trn_ids, pre_ids, trn_3d, proj_3d)

    # TODO(synk): for very large N, a token-tiled variant (TN tokens/step with
    # manual pltpu.make_async_copy row gathers) would amortize the ~0.35 us
    # per-grid-step overhead further.
    return out.reshape(B, S, 2 * D)


if __name__ == "__main__":
    # Small, module-consistent shapes.
    B, S = 2, 8                 # batch, sequence
    V_PRE, V_TRN = 256, 256     # pretrained / trainable vocab sizes
    P = 128                     # pretrained embedding dim (!= D -> Linear branch)
    D = 64                      # embedding_dim; 2*D = 128 -> lane-dense output
    PAD = 0                     # padding_index

    key = jax.random.PRNGKey(0)
    k1, k2, k3, k4, k5 = jax.random.split(key, 5)

    # Deterministic "parameters".
    pre_table = jax.random.normal(k1, (V_PRE, P), dtype=jnp.float32) * 0.1
    trn_table = jax.random.normal(k2, (V_TRN, D), dtype=jnp.float32) * 0.1
    # padding_index rows zeroed (matches torch.nn.Embedding padding_idx init).
    pre_table = pre_table.at[PAD].set(0.0)
    trn_table = trn_table.at[PAD].set(0.0)
    # torch.nn.Linear(P, D, bias=False).weight is [D, P]; pass transposed [P, D].
    proj_w = jax.random.normal(k3, (P, D), dtype=jnp.float32) * 0.1

    # Deterministic inputs (include some padding ids).
    input_ids = jax.random.randint(k4, (B, S), 0, V_TRN, dtype=jnp.int32)
    pretrained_ids = jax.random.randint(k5, (B, S), 0, V_PRE, dtype=jnp.int32)
    input_ids = input_ids.at[0, 0].set(PAD)
    pretrained_ids = pretrained_ids.at[0, 0].set(PAD)

    out = pretrain_embedding_forward(input_ids, pretrained_ids,
                                     pre_table, proj_w, trn_table)
    out = jax.block_until_ready(out)

    # Reference 1: gather of the pre-projected table (what the kernel computes).
    proj_table_ref = jnp.dot(pre_table, proj_w, precision=jax.lax.Precision.HIGHEST)
    ref_trn = jnp.take(trn_table, input_ids, axis=0)                    # [B,S,D]
    ref_pre = jnp.take(proj_table_ref, pretrained_ids, axis=0)          # [B,S,D]
    ref = jnp.concatenate([ref_trn, ref_pre], axis=-1)                  # [B,S,2D]
    assert out.shape == (B, S, 2 * D)
    assert jnp.allclose(out, ref, atol=1e-5, rtol=1e-5)

    # Reference 2: module order (lookup -> Linear); equivalent up to matmul rounding.
    ref_pre_mod = jnp.dot(jnp.take(pre_table, pretrained_ids, axis=0), proj_w,
                          precision=jax.lax.Precision.HIGHEST)
    ref_mod = jnp.concatenate([ref_trn, ref_pre_mod], axis=-1)
    assert jnp.allclose(out, ref_mod, atol=1e-3, rtol=1e-3)

    print("KERNEL_OK")
</pallas_src>

<mosaic_0001>
module attributes {stable_mosaic.version = 11 : i64} {
  func.func @_gather_concat_kernel(%arg0: i32, %arg1: memref<16xi32, #tpu.memory_space<smem>>, %arg2: memref<16xi32, #tpu.memory_space<smem>>, %arg3: memref<1x1x64xf32, #tpu.memory_space<vmem>>, %arg4: memref<1x1x64xf32, #tpu.memory_space<vmem>>, %arg5: memref<1x1x128xf32, #tpu.memory_space<vmem>>) attributes {dimension_semantics = [#tpu.dimension_semantics<parallel>], iteration_bounds = array<i64: 16>, scalar_prefetch = 2 : i64, scratch_operands = 0 : i64, tpu.core_type = #tpu.core_type<tc>, window_params = [{transform_indices = @transform_0, window_bounds = array<i64: 1, 1, 64>}, {transform_indices = @transform_1, window_bounds = array<i64: 1, 1, 64>}, {transform_indices = @transform_2, window_bounds = array<i64: 1, 1, 128>}]} {
    %c0 = arith.constant 0 : index
    %c0_0 = arith.constant 0 : index
    %c0_1 = arith.constant 0 : index
    %0 = vector.load %arg3[%c0, %c0_0, %c0_1] : memref<1x1x64xf32, #tpu.memory_space<vmem>>, vector<1x1x64xf32>
    %c0_2 = arith.constant 0 : index
    %c0_3 = arith.constant 0 : index
    %c0_4 = arith.constant 0 : index
    %1 = vector.load %arg5[%c0_2, %c0_3, %c0_4] : memref<1x1x128xf32, #tpu.memory_space<vmem>>, vector<1x1x64xf32>
    tpu.vector_store %arg5[%c0_2, %c0_3, %c0_4], %0 {strides = array<i32>} : memref<1x1x128xf32, #tpu.memory_space<vmem>>, vector<1x1x64xf32>,
    %c0_5 = arith.constant 0 : index
    %c0_6 = arith.constant 0 : index
    %c0_7 = arith.constant 0 : index
    %2 = vector.load %arg4[%c0_5, %c0_6, %c0_7] : memref<1x1x64xf32, #tpu.memory_space<vmem>>, vector<1x1x64xf32>
    %c0_8 = arith.constant 0 : index
    %c0_9 = arith.constant 0 : index
    %c64 = arith.constant 64 : index
    %3 = vector.load %arg5[%c0_8, %c0_9, %c64] : memref<1x1x128xf32, #tpu.memory_space<vmem>>, vector<1x1x64xf32>
    tpu.vector_store %arg5[%c0_8, %c0_9, %c64], %2 {strides = array<i32>} : memref<1x1x128xf32, #tpu.memory_space<vmem>>, vector<1x1x64xf32>,
    return
  }
  func.func @transform_0(%arg0: i32, %arg1: memref<16xi32, #tpu.memory_space<smem>>, %arg2: memref<16xi32, #tpu.memory_space<smem>>) -> (i32, i32, i32) {
    %0 = arith.index_cast %arg0 : i32 to index
    %1 = memref.load %arg1[%0] : memref<16xi32, #tpu.memory_space<smem>>
    %c0_i32 = arith.constant 0 : i32
    %c0_i32_0 = arith.constant 0 : i32
    %c0_i32_1 = arith.constant 0 : i32
    return %1, %c0_i32, %c0_i32_0 : i32, i32, i32
  }
  func.func @transform_1(%arg0: i32, %arg1: memref<16xi32, #tpu.memory_space<smem>>, %arg2: memref<16xi32, #tpu.memory_space<smem>>) -> (i32, i32, i32) {
    %0 = arith.index_cast %arg0 : i32 to index
    %1 = memref.load %arg2[%0] : memref<16xi32, #tpu.memory_space<smem>>
    %c0_i32 = arith.constant 0 : i32
    %c0_i32_0 = arith.constant 0 : i32
    %c0_i32_1 = arith.constant 0 : i32
    return %1, %c0_i32, %c0_i32_0 : i32, i32, i32
  }
  func.func @transform_2(%arg0: i32, %arg1: memref<16xi32, #tpu.memory_space<smem>>, %arg2: memref<16xi32, #tpu.memory_space<smem>>) -> (i32, i32, i32) {
    %c0_i32 = arith.constant 0 : i32
    %c0_i32_0 = arith.constant 0 : i32
    %c0_i32_1 = arith.constant 0 : i32
    return %arg0, %c0_i32, %c0_i32_0 : i32, i32, i32
  }
}

</mosaic_0001>

<llo_original>
// kernel: tpu_custom_call.1
$region0: #{tpu_custom_call.1}
  #allocation0 [shape = 'u32[]', space=smem, size = 0x4, offset = 0x4, fixed_abs, tag = 'smem constant byte address 0x4 - core index']
  #allocation1 [shape = 'u32[144,128]{1,0:T(1,128)}', space=vmem, size = 0x12000, scoped, tag = 'internal scratch']
  #allocation2 [shape = 's32[1]{0}', space=sflag, size = 0x4, scoped, tag = 'scoped memory for tpu_custom_call.1']
  #allocation3 [shape = 'u8[512]{0}', space=smem, size = 0x200, scoped, tag = 'prefetched SMEM operand 0']
  #allocation4 [shape = 'u8[512]{0}', space=smem, size = 0x200, scoped, tag = 'prefetched SMEM operand 1']
  %s0 = inlined_call_operand.vmem [shape: s32[16], index: 0, kind: input, shape index: {}]
  %s1 = inlined_call_operand.vmem [shape: s32[16], index: 1, kind: input, shape index: {}]
  %s2 = inlined_call_operand.vmem [shape: f32[256,1,64], index: 2, kind: input, shape index: {}]
  %s3 = inlined_call_operand.vmem [shape: f32[256,1,64], index: 3, kind: input, shape index: {}]
  %s4 = inlined_call_operand.hbm [shape: f32[16,1,128], index: 4, kind: output, shape index: {}]
  %s5 = sld [smem:[#allocation0]]
  $region41: #{tpu_custom_call.1} parent=0
    _
  %s7 = ssub.s32 1, %s5
  %s8 = scalar_select 0, %s7, %s5
  %s9 = sshll.u32 %s0, 4
  %s10 = int_to_ptr.vmem [resolvable:$true] %s9
  %12 = dma.vmem_to_smem %s10, 16, [#allocation3], [#allocation2]
  %s13 = sshll.u32 %s1, 4
  %s14 = int_to_ptr.vmem [resolvable:$true] %s13
  %16 = dma.vmem_to_smem %s14, 16, [#allocation4], [#allocation2]
  %17 = dma.done [#allocation2], 32
  %18 = sfence
  $region1: #{tpu_custom_call.1} parent=0
    #allocation5 [shape = 'u8[1024]{0}', space=vmem, size = 0x400, scoped, tag = 'output window, operand 0']
    #allocation6 [shape = 's32[2]{0}', space=sflag, size = 0x8, scoped, tag = 'scoped memory for tpu_custom_call.1']
    %19 = vsyncpa [#allocation6], 0
    %s20 = scalar_lea.sflag [#allocation6], 1
    %21 = vsyncpa %s20, 0
    loop: start=0, step=1, limit=18
    $region2: #{tpu_custom_call.1} parent=1 // loop_pre_header
      _
    $region3: #{tpu_custom_call.1} parent=1 // loop_header
      %s23 = sphi 0, %s27
      %p24 = scmp.ge.s32.totalorder %s23, 18
      %s35 = sphi 0, %s37
      %s38 = sphi 0, %s35
      %s39 = sphi 0, %s38
      %s55 = sphi 0, %s39
      %s63 = sphi 0, %s65
      %s66 = sphi 0, %s63
      %s67 = sphi 0, %s66
      %s83 = sphi 0, %s67
      %s89 = sphi 0, %s91
      %s92 = sphi 0, %s89
      %s93 = sphi 0, %s92
      %s109 = sphi 0, %s93
    $region4: #{tpu_custom_call.1} parent=1 // loop_header_branch
      %26 = sbr.rel (%p24) target = $region8
    $region5: #{tpu_custom_call.1} parent=1 // loop_body
      %s28 = ssub.s32 %s23, 1
      %s29 = ssub.s32 %s23, 2
      %s30 = sadd.s32 %s23, 1
      %s31 = sld [smem:[#allocation3 + %s23]]
      %s32 = sld [smem:[#allocation3 + %s30]]
      %s33 = ssub.s32 %s31, %s32
      %p34 = scmp.eq.s32.totalorder %s33, 0
      %s36 = sadd.s32 %s35, 1
      %s37 = scalar_select %p34, %s35, %s36
      %p40 = pneg %p34
      %p41 = scmp.eq.s32.totalorder %s23, 15
      %p42 = por %p40, %p41
      %p43 = scmp.ne.s32.totalorder %s35, %s38
      %p44 = scmp.eq.s32.totalorder %s23, 0
      %p45 = por %p43, %p44
      %p46 = scmp.ne.s32.totalorder %s35, %s38
      %p47 = scmp.eq.s32.totalorder %s28, 15
      %p48 = por %p46, %p47
      %p49 = scmp.ne.s32.totalorder %s38, %s39
      %p50 = scmp.eq.s32.totalorder %s28, 0
      %p51 = por %p49, %p50
      %p52 = scmp.ne.s32.totalorder %s38, %s39
      %p53 = scmp.eq.s32.totalorder %s29, 15
      %p54 = por %p52, %p53
      %p56 = scmp.ne.s32.totalorder %s39, %s55
      %p57 = scmp.eq.s32.totalorder %s29, 0
      %p58 = por %p56, %p57
      %s59 = sld [smem:[#allocation4 + %s23]]
      %s60 = sld [smem:[#allocation4 + %s30]]
      %s61 = ssub.s32 %s59, %s60
      %p62 = scmp.eq.s32.totalorder %s61, 0
      %s64 = sadd.s32 %s63, 1
      %s65 = scalar_select %p62, %s63, %s64
      %p68 = pneg %p62
      %p69 = scmp.eq.s32.totalorder %s23, 15
      %p70 = por %p68, %p69
      %p71 = scmp.ne.s32.totalorder %s63, %s66
      %p72 = scmp.eq.s32.totalorder %s23, 0
      %p73 = por %p71, %p72
      %p74 = scmp.ne.s32.totalorder %s63, %s66
      %p75 = scmp.eq.s32.totalorder %s28, 15
      %p76 = por %p74, %p75
      %p77 = scmp.ne.s32.totalorder %s66, %s67
      %p78 = scmp.eq.s32.totalorder %s28, 0
      %p79 = por %p77, %p78
      %p80 = scmp.ne.s32.totalorder %s66, %s67
      %p81 = scmp.eq.s32.totalorder %s29, 15
      %p82 = por %p80, %p81
      %p84 = scmp.ne.s32.totalorder %s67, %s83
      %p85 = scmp.eq.s32.totalorder %s29, 0
      %p86 = por %p84, %p85
      %s87 = ssub.s32 %s23, %s30
      %p88 = scmp.eq.s32.totalorder %s87, 0
      %s90 = sadd.s32 %s89, 1
      %s91 = scalar_select %p88, %s89, %s90
      %p94 = pneg %p88
      %p95 = scmp.eq.s32.totalorder %s23, 15
      %p96 = por %p94, %p95
      %p97 = scmp.ne.s32.totalorder %s89, %s92
      %p98 = scmp.eq.s32.totalorder %s23, 0
      %p99 = por %p97, %p98
      %p100 = scmp.ne.s32.totalorder %s89, %s92
      %p101 = scmp.eq.s32.totalorder %s28, 15
      %p102 = por %p100, %p101
      %p103 = scmp.ne.s32.totalorder %s92, %s93
      %p104 = scmp.eq.s32.totalorder %s28, 0
      %p105 = por %p103, %p104
      %p106 = scmp.ne.s32.totalorder %s92, %s93
      %p107 = scmp.eq.s32.totalorder %s29, 15
      %p108 = por %p106, %p107
      %p110 = scmp.ne.s32.totalorder %s93, %s109
      %p111 = scmp.eq.s32.totalorder %s29, 0
      %p112 = por %p110, %p111
      %p113 = scmp.le.s32.totalorder 1, %s23
      %p114 = scmp.lt.s32.totalorder %s23, 17
      %p115 = pnand %p113, %p114
      %p116 = pneg %p115
      // Predicated region
      $region9: #{tpu_custom_call.1} parent=5 // pred_check
        _
      $region10: #{tpu_custom_call.1} parent=5 // pred_check_branch
        %118 = sbr.rel (%p115) target = $region12
      $region11: #{tpu_custom_call.1} parent=5 // pred_region
        %s119 = ssub.s32 %s23, 1
      $region12: #{tpu_custom_call.1} parent=5 // pred_fallthru
        _
      %p120 = scmp.lt.s32.totalorder %s23, 16
      // Predicated region
      $region13: #{tpu_custom_call.1} parent=5 // pred_check
        %p121 = pneg %p120
      $region14: #{tpu_custom_call.1} parent=5 // pred_check_branch
        %123 = sbr.rel (%p121) target = $region16
      $region15: #{tpu_custom_call.1} parent=5 // pred_region
        // Predicated region
        $region17: #{tpu_custom_call.1} parent=15 // pred_check
          %p124 = pneg %p45
        $region18: #{tpu_custom_call.1} parent=15 // pred_check_branch
          %126 = sbr.rel (%p124) target = $region20
        $region19: #{tpu_custom_call.1} parent=15 // pred_region
          %s127 = sld [smem:[#allocation3 + %s23]]
          %p128 = scmp.lt.s32.totalorder %s127, 255
          %s129 = scalar_select %p128, %s127, 255
          %s130 = scalar_lea.vmem %s2, %s129
          %s131 = sld [smem:[#allocation3 + %s23]]
        $region20: #{tpu_custom_call.1} parent=15 // pred_fallthru
          _
        // Predicated region
        $region21: #{tpu_custom_call.1} parent=15 // pred_check
          %p132 = pneg %p73
        $region22: #{tpu_custom_call.1} parent=15 // pred_check_branch
          %134 = sbr.rel (%p132) target = $region24
        $region23: #{tpu_custom_call.1} parent=15 // pred_region
          %s135 = sld [smem:[#allocation4 + %s23]]
          %p136 = scmp.lt.s32.totalorder %s135, 255
          %s137 = scalar_select %p136, %s135, 255
          %s138 = scalar_lea.vmem %s3, %s137
          %s139 = sld [smem:[#allocation4 + %s23]]
        $region24: #{tpu_custom_call.1} parent=15 // pred_fallthru
          _
      $region16: #{tpu_custom_call.1} parent=5 // pred_fallthru
        _
      %p140 = scmp.le.s32.totalorder 1, %s23
      %p141 = scmp.lt.s32.totalorder %s23, 17
      %p142 = pnand %p140, %p141
      %p143 = pneg %p142
      // Predicated region
      $region25: #{tpu_custom_call.1} parent=5 // pred_check
        _
      $region26: #{tpu_custom_call.1} parent=5 // pred_check_branch
        %145 = sbr.rel (%p142) target = $region28
      $region27: #{tpu_custom_call.1} parent=5 // pred_region
        %s146 = ssub.s32 %s23, 1
        %s147 = sld [smem:[#allocation3 + %s28]]
        %p148 = scmp.lt.s32.totalorder %s147, 255
        %s149 = scalar_select %p148, %s147, 255
        %s150 = scalar_lea.vmem %s2, %s149
        %p151 = pneg %p51
        %p152 = pneg %p48
        %s153 = sld [smem:[#allocation4 + %s28]]
        %p154 = scmp.lt.s32.totalorder %s153, 255
        %s155 = scalar_select %p154, %s153, 255
        %s156 = scalar_lea.vmem %s3, %s155
        %p157 = pneg %p79
        %p158 = pneg %p76
        %p159 = pneg %p105
        %p160 = pneg %p102
        %s161 = sand.u32 %s92, 1
        %s162 = scalar_lea.sflag [#allocation6], %s161
        %s163 = sand.u32 %s92, 1
        %s164 = scalar_lea.vmem [#allocation5], %s163
        %s165 = sld [smem:[#allocation3 + %s28]]
        %p166 = scmp.lt.s32.totalorder %s165, 255
        %s167 = scalar_select %p166, %s165, 255
        %s168 = scalar_lea.vmem %s2, %s167
        %s169 = sld [smem:[#allocation3 + %s28]]
        %s170 = sld [smem:[#allocation4 + %s28]]
        %p171 = scmp.lt.s32.totalorder %s170, 255
        %s172 = scalar_select %p171, %s170, 255
        %s173 = scalar_lea.vmem %s3, %s172
        %s174 = sld [smem:[#allocation4 + %s28]]
        %v175 = vld [vmem:[%s168] sm:$0x1]
        %vm176 = vcmask 516096
        %177 = vst.msk [vmem:[%s164] sm:$0x1] %vm176, %v175
        %v178 = vld [vmem:[%s173] sm:$0x1]
        %v180 = vlaneseq
        %v181 = vshrl.u32 %v180, 7
        %v182 = vsub.s32 0, %v181
        %v183 = vrot.slane %v178, %v182
        %184 = vrot.lane.b32.xlu0 %v183, 64
        %v185 = vpop.permute.xlu0 %184
        %vm187 = vcmask 1040896
        %188 = vst.msk [vmem:[%s164] sm:$0x1] %vm187, %v185
        %s189 = sand.u32 %s92, 1
        %s190 = scalar_lea.sflag [#allocation6], %s189
        %s191 = sand.u32 %s92, 1
        %s192 = scalar_lea.vmem [#allocation5], %s191
        // Predicated region
        $region29: #{tpu_custom_call.1} parent=27 // pred_check
          %p193 = pneg %p102
        $region30: #{tpu_custom_call.1} parent=27 // pred_check_branch
          %195 = sbr.rel (%p193) target = $region32
        $region31: #{tpu_custom_call.1} parent=27 // pred_region
          %s197 = ssub.s32 16, 16
          %198 = vsyncadd %s190, %s197
          %s199 = smul.addr %s28, 16
          %s200 = scalar_lea.hbm %s4, %s199
          %s202 = sshll.u32 %s192, 4
          %s203 = int_to_ptr.vmem [resolvable:$true] %s202
          %205 = dma.vmem_to_hbm [thread:$0]  %s203, 16, %s200, %s190
        $region32: #{tpu_custom_call.1} parent=27 // pred_fallthru
          _
      $region28: #{tpu_custom_call.1} parent=5 // pred_fallthru
        _
      %p206 = scmp.le.s32.totalorder 2, %s23
      // Predicated region
      $region33: #{tpu_custom_call.1} parent=5 // pred_check
        %p207 = pneg %p206
      $region34: #{tpu_custom_call.1} parent=5 // pred_check_branch
        %209 = sbr.rel (%p207) target = $region36
      $region35: #{tpu_custom_call.1} parent=5 // pred_region
        %s210 = ssub.s32 %s23, 2
        // Predicated region
        $region37: #{tpu_custom_call.1} parent=35 // pred_check
          %p211 = pneg %p108
        $region38: #{tpu_custom_call.1} parent=35 // pred_check_branch
          %213 = sbr.rel (%p211) target = $region40
        $region39: #{tpu_custom_call.1} parent=35 // pred_region
          %s214 = sand.u32 %s93, 1
          %s215 = scalar_lea.sflag [#allocation6], %s214
          %s216 = sand.u32 %s93, 1
          %s217 = scalar_lea.vmem [#allocation5], %s216
          %218 = dma.done %s215, 16
        $region40: #{tpu_custom_call.1} parent=35 // pred_fallthru
          _
      $region36: #{tpu_custom_call.1} parent=5 // pred_fallthru
        _
    $region6: #{tpu_custom_call.1} parent=1 // loop_footer
      %s27 = sadd.s32 1, %s23
    $region7: #{tpu_custom_call.1} parent=1 // loop_footer_branch
      %22 = sbr.rel target = $region3
    $region8: #{tpu_custom_call.1} parent=1 // loop_exit
      _
    %219 = vsyncpa [#allocation6], 1
    %s220 = scalar_lea.sflag [#allocation6], 1
    %221 = vsyncpa %s220, 1

</llo_original>
